<compile_context>
chip_gen: v5e
topology: v5e:2x2
jax: 0.10.0
libtpu: 0.0.40
codegen_flags: <defaults>
</compile_context>

<pallas_src>
import functools

import jax
import jax.numpy as jnp
from jax.experimental import pallas as pl
from jax.experimental.pallas import tpu as pltpu

D_IN, D_H1, D_H2, D_OUT = 20, 64, 32, 18


def nestmlp_kernel(xT_ref, w1_ref, b1_ref, w2_ref, b2_ref, w3_ref, b3_ref,
                   o_ref, *, precision):
    # Fused MLP for one (20, TILE_B) batch tile, batch on lanes.
    dot = functools.partial(jnp.dot, preferred_element_type=jnp.float32,
                            precision=precision)
    h = dot(w1_ref[...], xT_ref[...])                  # (64, TILE_B) f32 acc
    h = jnp.maximum(h + b1_ref[...], 0.0)
    h = dot(w2_ref[...], h.astype(w2_ref.dtype))       # (32, TILE_B)
    h = jnp.maximum(h + b2_ref[...], 0.0)
    o = dot(w3_ref[...], h.astype(w3_ref.dtype))       # (18, TILE_B)
    o_ref[...] = (o + b3_ref[...]).astype(o_ref.dtype)


def _round_up(n, m):
    return (n + m - 1) // m * m


@functools.partial(jax.jit, static_argnames=("tile_b", "compute_dtype"))
def nestmlp_forward(x, params, *, tile_b=2048, compute_dtype=jnp.bfloat16):
    """x: (B, 20) -> (B, 18); same forward semantics as the PyTorch NestMLP."""
    w1, b1, w2, b2, w3, b3 = params
    B = x.shape[0]
    out_dtype = x.dtype
    cdt = jnp.dtype(compute_dtype)

    # Batch onto the lane axis; cast activations/weights to the compute dtype.
    xT = x.T.astype(cdt)                                       # (20, B)
    w1c, w2c, w3c = (w.astype(cdt) for w in (w1, w2, w3))      # biases stay f32

    # Lane tile: multiple of 128 (or the full batch when B is small), capped
    # at tile_b and at ~ceil(B/2) so v7x's two TensorCores each get work.
    tile_b = max(128, _round_up(tile_b, 128))
    if B <= 128:
        tb = B                                   # block == full dim: always legal
    else:
        tb = min(tile_b, max(128, _round_up(pl.cdiv(B, 2), 128)))
    grid = (pl.cdiv(B, tb),)                     # ragged last tile handled by clipping

    def const_spec(a):
        # Same block every grid step -> DMA'd once, stays VMEM-resident.
        return pl.BlockSpec(a.shape, lambda i: (0, 0))

    precision = (jax.lax.Precision.HIGHEST if cdt == jnp.float32
                 else jax.lax.Precision.DEFAULT)

    oT = pl.pallas_call(
        functools.partial(nestmlp_kernel, precision=precision),
        out_shape=jax.ShapeDtypeStruct((D_OUT, B), out_dtype),
        grid=grid,
        in_specs=[
            pl.BlockSpec((D_IN, tb), lambda i: (0, i)),
            const_spec(w1c), const_spec(b1),
            const_spec(w2c), const_spec(b2),
            const_spec(w3c), const_spec(b3),
        ],
        out_specs=pl.BlockSpec((D_OUT, tb), lambda i: (0, i)),
        compiler_params=pltpu.CompilerParams(
            # Batch tiles are independent: allows the v7x megacore split;
            # harmless (single TC) on v5e/v6e.
            dimension_semantics=("parallel",),
        ),
    )(xT, w1c, b1, w2c, b2, w3c, b3)

    return oT.T                                                 # (B, 18)


def init_params(key):
    # PyTorch nn.Linear layout: W (out, in), b (out,) kept as (out, 1);
    # default init U(-1/sqrt(fan_in), 1/sqrt(fan_in)).
    def linear(k, fan_in, fan_out):
        kw, kb = jax.random.split(k)
        bound = 1.0 / jnp.sqrt(fan_in)
        w = jax.random.uniform(kw, (fan_out, fan_in), jnp.float32, -bound, bound)
        b = jax.random.uniform(kb, (fan_out, 1), jnp.float32, -bound, bound)
        return w, b

    k1, k2, k3 = jax.random.split(key, 3)
    w1, b1 = linear(k1, D_IN, D_H1)
    w2, b2 = linear(k2, D_H1, D_H2)
    w3, b3 = linear(k3, D_H2, D_OUT)
    return (w1, b1, w2, b2, w3, b3)


def _ref_forward(x, params):
    w1, b1, w2, b2, w3, b3 = params
    h = jnp.maximum(x @ w1.T + b1.T, 0.0)
    h = jnp.maximum(h @ w2.T + b2.T, 0.0)
    return h @ w3.T + b3.T


if __name__ == "__main__":
    key = jax.random.PRNGKey(0)
    kx, kp = jax.random.split(key)
    params = init_params(kp)

    # Small batch (single full-batch tile) and a non-tile-multiple batch that
    # exercises the 2-step grid + ragged-last-tile clipping path.
    x_small = jax.random.normal(kx, (8, D_IN), jnp.float32)
    x_big = jax.random.normal(kx, (1000, D_IN), jnp.float32)

    # f32 path (pinned HIGHEST precision): exact module semantics.
    for x in (x_small, x_big):
        out = jax.block_until_ready(
            nestmlp_forward(x, params, compute_dtype=jnp.float32))
        assert out.shape == (x.shape[0], D_OUT)
        assert jnp.allclose(out, _ref_forward(x, params), atol=1e-5, rtol=1e-5)

    # Default bf16 path (single-pass MXU, f32 accumulation): looser tolerance.
    for x in (x_small, x_big):
        out = jax.block_until_ready(nestmlp_forward(x, params))
        assert out.shape == (x.shape[0], D_OUT)
        assert jnp.allclose(out, _ref_forward(x, params), atol=5e-2, rtol=5e-2)

    print("KERNEL_OK")
</pallas_src>

<mosaic_0001>
module attributes {stable_mosaic.version = 11 : i64} {
  func.func @nestmlp_kernel(%arg0: i32, %arg1: memref<20x8xf32, #tpu.memory_space<vmem>>, %arg2: memref<64x20xf32, #tpu.memory_space<vmem>>, %arg3: memref<64x1xf32, #tpu.memory_space<vmem>>, %arg4: memref<32x64xf32, #tpu.memory_space<vmem>>, %arg5: memref<32x1xf32, #tpu.memory_space<vmem>>, %arg6: memref<18x32xf32, #tpu.memory_space<vmem>>, %arg7: memref<18x1xf32, #tpu.memory_space<vmem>>, %arg8: memref<18x8xf32, #tpu.memory_space<vmem>>) attributes {dimension_semantics = [#tpu.dimension_semantics<parallel>], iteration_bounds = array<i64: 1>, scalar_prefetch = 0 : i64, scratch_operands = 0 : i64, tpu.core_type = #tpu.core_type<tc>, window_params = [{transform_indices = @transform_0, window_bounds = array<i64: 20, 8>}, {pipeline_mode = #tpu.pipeline_mode<synchronous>, transform_indices = @transform_1, window_bounds = array<i64: 64, 20>}, {pipeline_mode = #tpu.pipeline_mode<synchronous>, transform_indices = @transform_2, window_bounds = array<i64: 64, 1>}, {pipeline_mode = #tpu.pipeline_mode<synchronous>, transform_indices = @transform_3, window_bounds = array<i64: 32, 64>}, {pipeline_mode = #tpu.pipeline_mode<synchronous>, transform_indices = @transform_4, window_bounds = array<i64: 32, 1>}, {pipeline_mode = #tpu.pipeline_mode<synchronous>, transform_indices = @transform_5, window_bounds = array<i64: 18, 32>}, {pipeline_mode = #tpu.pipeline_mode<synchronous>, transform_indices = @transform_6, window_bounds = array<i64: 18, 1>}, {transform_indices = @transform_7, window_bounds = array<i64: 18, 8>}]} {
    %c0 = arith.constant 0 : index
    %c0_0 = arith.constant 0 : index
    %0 = vector.load %arg2[%c0, %c0_0] : memref<64x20xf32, #tpu.memory_space<vmem>>, vector<64x20xf32>
    %c0_1 = arith.constant 0 : index
    %c0_2 = arith.constant 0 : index
    %1 = vector.load %arg1[%c0_1, %c0_2] : memref<20x8xf32, #tpu.memory_space<vmem>>, vector<20x8xf32>
    %cst = arith.constant dense<0.000000e+00> : vector<64x8xf32>
    %2 = tpu.matmul %0, %1, %cst {dimension_numbers = #tpu.dot_dimension_numbers<[1], [0], [0], [1], [0, 0, 1, 1], [], []>, precision = #tpu.contract_precision<fp32>} : vector<64x20xf32>, vector<20x8xf32>, vector<64x8xf32> -> vector<64x8xf32>
    %c0_3 = arith.constant 0 : index
    %c0_4 = arith.constant 0 : index
    %3 = vector.load %arg3[%c0_3, %c0_4] : memref<64x1xf32, #tpu.memory_space<vmem>>, vector<64x1xf32>
    %4 = vector.broadcast %3 : vector<64x1xf32> to vector<64x8xf32>
    %5 = arith.addf %2, %4 : vector<64x8xf32>
    %cst_5 = arith.constant 0.000000e+00 : f32
    %6 = vector.broadcast %cst_5 : f32 to vector<64x8xf32>
    %7 = arith.maximumf %5, %6 : vector<64x8xf32>
    %c0_6 = arith.constant 0 : index
    %c0_7 = arith.constant 0 : index
    %8 = vector.load %arg4[%c0_6, %c0_7] : memref<32x64xf32, #tpu.memory_space<vmem>>, vector<32x64xf32>
    %cst_8 = arith.constant dense<0.000000e+00> : vector<32x8xf32>
    %9 = tpu.matmul %8, %7, %cst_8 {dimension_numbers = #tpu.dot_dimension_numbers<[1], [0], [0], [1], [0, 0, 1, 1], [], []>, precision = #tpu.contract_precision<fp32>} : vector<32x64xf32>, vector<64x8xf32>, vector<32x8xf32> -> vector<32x8xf32>
    %c0_9 = arith.constant 0 : index
    %c0_10 = arith.constant 0 : index
    %10 = vector.load %arg5[%c0_9, %c0_10] : memref<32x1xf32, #tpu.memory_space<vmem>>, vector<32x1xf32>
    %11 = vector.broadcast %10 : vector<32x1xf32> to vector<32x8xf32>
    %12 = arith.addf %9, %11 : vector<32x8xf32>
    %cst_11 = arith.constant 0.000000e+00 : f32
    %13 = vector.broadcast %cst_11 : f32 to vector<32x8xf32>
    %14 = arith.maximumf %12, %13 : vector<32x8xf32>
    %c0_12 = arith.constant 0 : index
    %c0_13 = arith.constant 0 : index
    %15 = vector.load %arg6[%c0_12, %c0_13] : memref<18x32xf32, #tpu.memory_space<vmem>>, vector<18x32xf32>
    %cst_14 = arith.constant dense<0.000000e+00> : vector<18x8xf32>
    %16 = tpu.matmul %15, %14, %cst_14 {dimension_numbers = #tpu.dot_dimension_numbers<[1], [0], [0], [1], [0, 0, 1, 1], [], []>, precision = #tpu.contract_precision<fp32>} : vector<18x32xf32>, vector<32x8xf32>, vector<18x8xf32> -> vector<18x8xf32>
    %c0_15 = arith.constant 0 : index
    %c0_16 = arith.constant 0 : index
    %17 = vector.load %arg7[%c0_15, %c0_16] : memref<18x1xf32, #tpu.memory_space<vmem>>, vector<18x1xf32>
    %18 = vector.broadcast %17 : vector<18x1xf32> to vector<18x8xf32>
    %19 = arith.addf %16, %18 : vector<18x8xf32>
    %c0_17 = arith.constant 0 : index
    %c0_18 = arith.constant 0 : index
    %20 = vector.load %arg8[%c0_17, %c0_18] : memref<18x8xf32, #tpu.memory_space<vmem>>, vector<18x8xf32>
    tpu.vector_store %arg8[%c0_17, %c0_18], %19 {strides = array<i32>} : memref<18x8xf32, #tpu.memory_space<vmem>>, vector<18x8xf32>,
    return
  }
  func.func @transform_0(%arg0: i32) -> (i32, i32) {
    %c0_i32 = arith.constant 0 : i32
    %c0_i32_0 = arith.constant 0 : i32
    return %c0_i32, %arg0 : i32, i32
  }
  func.func @transform_1(%arg0: i32) -> (i32, i32) {
    %c0_i32 = arith.constant 0 : i32
    %c0_i32_0 = arith.constant 0 : i32
    %c0_i32_1 = arith.constant 0 : i32
    return %c0_i32, %c0_i32_0 : i32, i32
  }
  func.func @transform_2(%arg0: i32) -> (i32, i32) {
    %c0_i32 = arith.constant 0 : i32
    %c0_i32_0 = arith.constant 0 : i32
    %c0_i32_1 = arith.constant 0 : i32
    return %c0_i32, %c0_i32_0 : i32, i32
  }
  func.func @transform_3(%arg0: i32) -> (i32, i32) {
    %c0_i32 = arith.constant 0 : i32
    %c0_i32_0 = arith.constant 0 : i32
    %c0_i32_1 = arith.constant 0 : i32
    return %c0_i32, %c0_i32_0 : i32, i32
  }
  func.func @transform_4(%arg0: i32) -> (i32, i32) {
    %c0_i32 = arith.constant 0 : i32
    %c0_i32_0 = arith.constant 0 : i32
    %c0_i32_1 = arith.constant 0 : i32
    return %c0_i32, %c0_i32_0 : i32, i32
  }
  func.func @transform_5(%arg0: i32) -> (i32, i32) {
    %c0_i32 = arith.constant 0 : i32
    %c0_i32_0 = arith.constant 0 : i32
    %c0_i32_1 = arith.constant 0 : i32
    return %c0_i32, %c0_i32_0 : i32, i32
  }
  func.func @transform_6(%arg0: i32) -> (i32, i32) {
    %c0_i32 = arith.constant 0 : i32
    %c0_i32_0 = arith.constant 0 : i32
    %c0_i32_1 = arith.constant 0 : i32
    return %c0_i32, %c0_i32_0 : i32, i32
  }
  func.func @transform_7(%arg0: i32) -> (i32, i32) {
    %c0_i32 = arith.constant 0 : i32
    %c0_i32_0 = arith.constant 0 : i32
    return %c0_i32, %arg0 : i32, i32
  }
}

</mosaic_0001>

<llo_original>
// kernel: nestmlp_forward.1
$region0: #{nestmlp_forward.1}
  #allocation0 [shape = 'u32[]', space=smem, size = 0x4, offset = 0x4, fixed_abs, tag = 'smem constant byte address 0x4 - core index']
  #allocation1 [shape = 'u32[72,128]{1,0:T(1,128)}', space=vmem, size = 0x9000, scoped, tag = 'internal scratch']
  %s0 = inlined_call_operand.vmem [shape: f32[20,8], index: 0, kind: input, shape index: {}]
  %s1 = inlined_call_operand.vmem [shape: f32[64,20], index: 1, kind: input, shape index: {}]
  %s2 = inlined_call_operand.vmem [shape: f32[64,1], index: 2, kind: input, shape index: {}]
  %s3 = inlined_call_operand.vmem [shape: f32[32,64], index: 3, kind: input, shape index: {}]
  %s4 = inlined_call_operand.vmem [shape: f32[32,1], index: 4, kind: input, shape index: {}]
  %s5 = inlined_call_operand.vmem [shape: f32[18,32], index: 5, kind: input, shape index: {}]
  %s6 = inlined_call_operand.vmem [shape: f32[18,1], index: 6, kind: input, shape index: {}]
  %s7 = inlined_call_operand.vmem [shape: f32[18,8], index: 7, kind: output, shape index: {}]
  %s8 = sld [smem:[#allocation0]]
  $region38: #{nestmlp_forward.1} parent=0
    _
  %s10 = ssub.s32 1, %s8
  %s11 = scalar_select 0, %s10, %s8
  // Predicated region
  $region2: #{nestmlp_forward.1} parent=0 // pred_check
    _
  $region3: #{nestmlp_forward.1} parent=0 // pred_check_branch
    %13 = sbr.rel (0) target = $region5
  $region4: #{nestmlp_forward.1} parent=0 // pred_region
    _
  $region5: #{nestmlp_forward.1} parent=0 // pred_fallthru
    _
  // Predicated region
  $region6: #{nestmlp_forward.1} parent=0 // pred_check
    _
  $region7: #{nestmlp_forward.1} parent=0 // pred_check_branch
    %15 = sbr.rel (0) target = $region9
  $region8: #{nestmlp_forward.1} parent=0 // pred_region
    _
  $region9: #{nestmlp_forward.1} parent=0 // pred_fallthru
    _
  // Predicated region
  $region10: #{nestmlp_forward.1} parent=0 // pred_check
    _
  $region11: #{nestmlp_forward.1} parent=0 // pred_check_branch
    %17 = sbr.rel (0) target = $region13
  $region12: #{nestmlp_forward.1} parent=0 // pred_region
    _
  $region13: #{nestmlp_forward.1} parent=0 // pred_fallthru
    _
  // Predicated region
  $region14: #{nestmlp_forward.1} parent=0 // pred_check
    _
  $region15: #{nestmlp_forward.1} parent=0 // pred_check_branch
    %19 = sbr.rel (0) target = $region17
  $region16: #{nestmlp_forward.1} parent=0 // pred_region
    _
  $region17: #{nestmlp_forward.1} parent=0 // pred_fallthru
    _
  // Predicated region
  $region18: #{nestmlp_forward.1} parent=0 // pred_check
    _
  $region19: #{nestmlp_forward.1} parent=0 // pred_check_branch
    %21 = sbr.rel (0) target = $region21
  $region20: #{nestmlp_forward.1} parent=0 // pred_region
    _
  $region21: #{nestmlp_forward.1} parent=0 // pred_fallthru
    _
  // Predicated region
  $region22: #{nestmlp_forward.1} parent=0 // pred_check
    _
  $region23: #{nestmlp_forward.1} parent=0 // pred_check_branch
    %23 = sbr.rel (0) target = $region25
  $region24: #{nestmlp_forward.1} parent=0 // pred_region
    _
  $region25: #{nestmlp_forward.1} parent=0 // pred_fallthru
    _
  // Predicated region
  $region26: #{nestmlp_forward.1} parent=0 // pred_check
    _
  $region27: #{nestmlp_forward.1} parent=0 // pred_check_branch
    %25 = sbr.rel (0) target = $region29
  $region28: #{nestmlp_forward.1} parent=0 // pred_region
    _
  $region29: #{nestmlp_forward.1} parent=0 // pred_fallthru
    _
  %v26 = vld [vmem:[%s1] sm:$0xff]
  %v27 = vld [vmem:[%s1 + $0x8] sm:$0xff]
  %v28 = vld [vmem:[%s1 + $0x10] sm:$0xff]
  %v29 = vld [vmem:[%s1 + $0x18] sm:$0xff]
  %v30 = vld [vmem:[%s1 + $0x20] sm:$0xff]
  %v31 = vld [vmem:[%s1 + $0x28] sm:$0xff]
  %v32 = vld [vmem:[%s1 + $0x30] sm:$0xff]
  %v33 = vld [vmem:[%s1 + $0x38] sm:$0xff]
  %v34 = vld [vmem:[%s0] sm:$0xff]
  %v35 = vld [vmem:[%s0 + $0x8] sm:$0xff]
  %v36 = vld [vmem:[%s0 + $0x10] sm:$0xf]
  %v37 = vld [vmem:[%s2] sm:$0xff]
  %v38 = vld [vmem:[%s2 + $0x8] sm:$0xff]
  %v39 = vld [vmem:[%s2 + $0x10] sm:$0xff]
  %v40 = vld [vmem:[%s2 + $0x18] sm:$0xff]
  %v41 = vld [vmem:[%s2 + $0x20] sm:$0xff]
  %v42 = vld [vmem:[%s2 + $0x28] sm:$0xff]
  %v43 = vld [vmem:[%s2 + $0x30] sm:$0xff]
  %v44 = vld [vmem:[%s2 + $0x38] sm:$0xff]
  %46 = vset.pattern.permute.xlu0 0
  %47 = vperm.xlu0 %46, %v37
  %v48 = vpop.permute.xlu0 %47
  %51 = vset.pattern.permute.xlu0 0
  %52 = vperm.xlu0 %51, %v38
  %v53 = vpop.permute.xlu0 %52
  %56 = vset.pattern.permute.xlu0 0
  %57 = vperm.xlu0 %56, %v39
  %v58 = vpop.permute.xlu0 %57
  %61 = vset.pattern.permute.xlu0 0
  %62 = vperm.xlu0 %61, %v40
  %v63 = vpop.permute.xlu0 %62
  %66 = vset.pattern.permute.xlu0 0
  %67 = vperm.xlu0 %66, %v41
  %v68 = vpop.permute.xlu0 %67
  %71 = vset.pattern.permute.xlu0 0
  %72 = vperm.xlu0 %71, %v42
  %v73 = vpop.permute.xlu0 %72
  %76 = vset.pattern.permute.xlu0 0
  %77 = vperm.xlu0 %76, %v43
  %v78 = vpop.permute.xlu0 %77
  %81 = vset.pattern.permute.xlu0 0
  %82 = vperm.xlu0 %81, %v44
  %v83 = vpop.permute.xlu0 %82
  %vm85 = vcmask 162816
  %v87 = vsel %vm85, %v26, 0
  %v90 = vsel %vm85, %v27, 0
  %v93 = vsel %vm85, %v28, 0
  %v96 = vsel %vm85, %v29, 0
  %v99 = vsel %vm85, %v30, 0
  %v102 = vsel %vm85, %v31, 0
  %v105 = vsel %vm85, %v32, 0
  %v108 = vsel %vm85, %v33, 0
  %vm110 = vcmask 1043456
  %v112 = vsel %vm110, %v36, 0
  %114 = vmatpush.msra.mxu0 0.0
  %115 = vmatpush.msra.mxu0 0.0
  %116 = vmatpush.msra.mxu0 0.0
  %117 = vmatpush.msra.mxu0 0.0
  %118 = vmatpush.msra.mxu0 0.0
  %119 = vmatpush.msra.mxu0 0.0
  %120 = vmatpush.msra.mxu0 0.0
  %121 = vmatpush.msra.mxu0 0.0
  %122 = vmatpush.msra.mxu0 0.0
  %123 = vmatpush.msra.mxu0 0.0
  %124 = vmatpush.msra.mxu0 0.0
  %125 = vmatpush.msra.mxu0 0.0
  %126 = vmatpush.msra.mxu0 0.0
  %v127 = vand.u32 %v112, 4294901760
  %128 = vmatpush.msra.mxu0 %v127
  %v129 = vand.u32 %v35, 4294901760
  %130 = vmatpush.msra.mxu0 %v129
  %v131 = vand.u32 %v34, 4294901760
  %132 = vmatpush.msra.mxu0 %v131
  %v133 = vand.u32 %v87, 4294901760
  %v134 = vsub.f32 %v87, %v133
  %v135 = vand.u32 %v134, 4294901760
  %v136 = vsub.f32 %v134, %v135
  %v137 = vand.u32 %v136, 4294901760
  %138 = vmatmul.f32.gmra.mxu0 %v137
  %v139 = vpop.f32.mrf.mxu0
  %v140 = vadd.f32 %v48, %v139
  %v141 = vand.u32 %v90, 4294901760
  %v142 = vsub.f32 %v90, %v141
  %v143 = vand.u32 %v142, 4294901760
  %v144 = vsub.f32 %v142, %v143
  %v145 = vand.u32 %v144, 4294901760
  %146 = vmatmul.f32.gmra.mxu0 %v145
  %v147 = vpop.f32.mrf.mxu0
  %v148 = vadd.f32 %v53, %v147
  %v149 = vand.u32 %v93, 4294901760
  %v150 = vsub.f32 %v93, %v149
  %v151 = vand.u32 %v150, 4294901760
  %v152 = vsub.f32 %v150, %v151
  %v153 = vand.u32 %v152, 4294901760
  %154 = vmatmul.f32.gmra.mxu0 %v153
  %v155 = vpop.f32.mrf.mxu0
  %v156 = vadd.f32 %v58, %v155
  %v157 = vand.u32 %v96, 4294901760
  %v158 = vsub.f32 %v96, %v157
  %v159 = vand.u32 %v158, 4294901760
  %v160 = vsub.f32 %v158, %v159
  %v161 = vand.u32 %v160, 4294901760
  %162 = vmatmul.f32.gmra.mxu0 %v161
  %v163 = vpop.f32.mrf.mxu0
  %v164 = vadd.f32 %v63, %v163
  %v165 = vand.u32 %v99, 4294901760
  %v166 = vsub.f32 %v99, %v165
  %v167 = vand.u32 %v166, 4294901760
  %v168 = vsub.f32 %v166, %v167
  %v169 = vand.u32 %v168, 4294901760
  %170 = vmatmul.f32.gmra.mxu0 %v169
  %v171 = vpop.f32.mrf.mxu0
  %v172 = vadd.f32 %v68, %v171
  %v173 = vand.u32 %v102, 4294901760
  %v174 = vsub.f32 %v102, %v173
  %v175 = vand.u32 %v174, 4294901760
  %v176 = vsub.f32 %v174, %v175
  %v177 = vand.u32 %v176, 4294901760
  %178 = vmatmul.f32.gmra.mxu0 %v177
  %v179 = vpop.f32.mrf.mxu0
  %v180 = vadd.f32 %v73, %v179
  %v181 = vand.u32 %v105, 4294901760
  %v182 = vsub.f32 %v105, %v181
  %v183 = vand.u32 %v182, 4294901760
  %v184 = vsub.f32 %v182, %v183
  %v185 = vand.u32 %v184, 4294901760
  %186 = vmatmul.f32.gmra.mxu0 %v185
  %v187 = vpop.f32.mrf.mxu0
  %v188 = vadd.f32 %v78, %v187
  %v189 = vand.u32 %v108, 4294901760
  %v190 = vsub.f32 %v108, %v189
  %v191 = vand.u32 %v190, 4294901760
  %v192 = vsub.f32 %v190, %v191
  %v193 = vand.u32 %v192, 4294901760
  %194 = vmatmul.f32.gmra.mxu0 %v193
  %v195 = vpop.f32.mrf.mxu0
  %v196 = vadd.f32 %v83, %v195
  %197 = vdwg.mxu0
  %198 = vmatpush.msra.mxu0 0.0
  %199 = vmatpush.msra.mxu0 0.0
  %200 = vmatpush.msra.mxu0 0.0
  %201 = vmatpush.msra.mxu0 0.0
  %202 = vmatpush.msra.mxu0 0.0
  %203 = vmatpush.msra.mxu0 0.0
  %204 = vmatpush.msra.mxu0 0.0
  %205 = vmatpush.msra.mxu0 0.0
  %206 = vmatpush.msra.mxu0 0.0
  %207 = vmatpush.msra.mxu0 0.0
  %208 = vmatpush.msra.mxu0 0.0
  %209 = vmatpush.msra.mxu0 0.0
  %210 = vmatpush.msra.mxu0 0.0
  %v211 = vand.u32 %v112, 4294901760
  %v212 = vsub.f32 %v112, %v211
  %v213 = vand.u32 %v212, 4294901760
  %v214 = vsub.f32 %v212, %v213
  %v215 = vand.u32 %v214, 4294901760
  %216 = vmatpush.msra.mxu0 %v215
  %v217 = vand.u32 %v35, 4294901760
  %v218 = vsub.f32 %v35, %v217
  %v219 = vand.u32 %v218, 4294901760
  %v220 = vsub.f32 %v218, %v219
  %v221 = vand.u32 %v220, 4294901760
  %222 = vmatpush.msra.mxu0 %v221
  %v223 = vand.u32 %v34, 4294901760
  %v224 = vsub.f32 %v34, %v223
  %v225 = vand.u32 %v224, 4294901760
  %v226 = vsub.f32 %v224, %v225
  %v227 = vand.u32 %v226, 4294901760
  %228 = vmatpush.msra.mxu0 %v227
  %v229 = vand.u32 %v87, 4294901760
  %230 = vmatmul.f32.gmra.mxu0 %v229
  %v231 = vpop.f32.mrf.mxu0
  %v232 = vadd.f32 %v140, %v231
  %v233 = vand.u32 %v90, 4294901760
  %234 = vmatmul.f32.gmra.mxu0 %v233
  %v235 = vpop.f32.mrf.mxu0
  %v236 = vadd.f32 %v148, %v235
  %v237 = vand.u32 %v93, 4294901760
  %238 = vmatmul.f32.gmra.mxu0 %v237
  %v239 = vpop.f32.mrf.mxu0
  %v240 = vadd.f32 %v156, %v239
  %v241 = vand.u32 %v96, 4294901760
  %242 = vmatmul.f32.gmra.mxu0 %v241
  %v243 = vpop.f32.mrf.mxu0
  %v244 = vadd.f32 %v164, %v243
  %v245 = vand.u32 %v99, 4294901760
  %246 = vmatmul.f32.gmra.mxu0 %v245
  %v247 = vpop.f32.mrf.mxu0
  %v248 = vadd.f32 %v172, %v247
  %v249 = vand.u32 %v102, 4294901760
  %250 = vmatmul.f32.gmra.mxu0 %v249
  %v251 = vpop.f32.mrf.mxu0
  %v252 = vadd.f32 %v180, %v251
  %v253 = vand.u32 %v105, 4294901760
  %254 = vmatmul.f32.gmra.mxu0 %v253
  %v255 = vpop.f32.mrf.mxu0
  %v256 = vadd.f32 %v188, %v255
  %v257 = vand.u32 %v108, 4294901760
  %258 = vmatmul.f32.gmra.mxu0 %v257
  %v259 = vpop.f32.mrf.mxu0
  %v260 = vadd.f32 %v196, %v259
  %261 = vdwg.mxu0
  %262 = vmatpush.msra.mxu0 0.0
  %263 = vmatpush.msra.mxu0 0.0
  %264 = vmatpush.msra.mxu0 0.0
  %265 = vmatpush.msra.mxu0 0.0
  %266 = vmatpush.msra.mxu0 0.0
  %267 = vmatpush.msra.mxu0 0.0
  %268 = vmatpush.msra.mxu0 0.0
  %269 = vmatpush.msra.mxu0 0.0
  %270 = vmatpush.msra.mxu0 0.0
  %271 = vmatpush.msra.mxu0 0.0
  %272 = vmatpush.msra.mxu0 0.0
  %273 = vmatpush.msra.mxu0 0.0
  %274 = vmatpush.msra.mxu0 0.0
  %v275 = vand.u32 %v112, 4294901760
  %v276 = vsub.f32 %v112, %v275
  %277 = vmatpush.msra.mxu0 %v276
  %v278 = vand.u32 %v35, 4294901760
  %v279 = vsub.f32 %v35, %v278
  %280 = vmatpush.msra.mxu0 %v279
  %v281 = vand.u32 %v34, 4294901760
  %v282 = vsub.f32 %v34, %v281
  %283 = vmatpush.msra.mxu0 %v282
  %v284 = vand.u32 %v87, 4294901760
  %v285 = vsub.f32 %v87, %v284
  %286 = vmatmul.f32.gmra.mxu0 %v285
  %v287 = vpop.f32.mrf.mxu0
  %v288 = vadd.f32 %v232, %v287
  %v289 = vand.u32 %v90, 4294901760
  %v290 = vsub.f32 %v90, %v289
  %291 = vmatmul.f32.gmra.mxu0 %v290
  %v292 = vpop.f32.mrf.mxu0
  %v293 = vadd.f32 %v236, %v292
  %v294 = vand.u32 %v93, 4294901760
  %v295 = vsub.f32 %v93, %v294
  %296 = vmatmul.f32.gmra.mxu0 %v295
  %v297 = vpop.f32.mrf.mxu0
  %v298 = vadd.f32 %v240, %v297
  %v299 = vand.u32 %v96, 4294901760
  %v300 = vsub.f32 %v96, %v299
  %301 = vmatmul.f32.gmra.mxu0 %v300
  %v302 = vpop.f32.mrf.mxu0
  %v303 = vadd.f32 %v244, %v302
  %v304 = vand.u32 %v99, 4294901760
  %v305 = vsub.f32 %v99, %v304
  %306 = vmatmul.f32.gmra.mxu0 %v305
  %v307 = vpop.f32.mrf.mxu0
  %v308 = vadd.f32 %v248, %v307
  %v309 = vand.u32 %v102, 4294901760
  %v310 = vsub.f32 %v102, %v309
  %311 = vmatmul.f32.gmra.mxu0 %v310
  %v312 = vpop.f32.mrf.mxu0
  %v313 = vadd.f32 %v252, %v312
  %v314 = vand.u32 %v105, 4294901760
  %v315 = vsub.f32 %v105, %v314
  %316 = vmatmul.f32.gmra.mxu0 %v315
  %v317 = vpop.f32.mrf.mxu0
  %v318 = vadd.f32 %v256, %v317
  %v319 = vand.u32 %v108, 4294901760
  %v320 = vsub.f32 %v108, %v319
  %321 = vmatmul.f32.gmra.mxu0 %v320
  %v322 = vpop.f32.mrf.mxu0
  %v323 = vadd.f32 %v260, %v322
  %324 = vdwg.mxu0
  %325 = vmatpush.msra.mxu0 0.0
  %326 = vmatpush.msra.mxu0 0.0
  %327 = vmatpush.msra.mxu0 0.0
  %328 = vmatpush.msra.mxu0 0.0
  %329 = vmatpush.msra.mxu0 0.0
  %330 = vmatpush.msra.mxu0 0.0
  %331 = vmatpush.msra.mxu0 0.0
  %332 = vmatpush.msra.mxu0 0.0
  %333 = vmatpush.msra.mxu0 0.0
  %334 = vmatpush.msra.mxu0 0.0
  %335 = vmatpush.msra.mxu0 0.0
  %336 = vmatpush.msra.mxu0 0.0
  %337 = vmatpush.msra.mxu0 0.0
  %v338 = vand.u32 %v112, 4294901760
  %339 = vmatpush.msra.mxu0 %v338
  %v340 = vand.u32 %v35, 4294901760
  %341 = vmatpush.msra.mxu0 %v340
  %v342 = vand.u32 %v34, 4294901760
  %343 = vmatpush.msra.mxu0 %v342
  %v344 = vand.u32 %v87, 4294901760
  %v345 = vsub.f32 %v87, %v344
  %v346 = vand.u32 %v345, 4294901760
  %347 = vmatmul.f32.gmra.mxu0 %v346
  %v348 = vpop.f32.mrf.mxu0
  %v349 = vadd.f32 %v288, %v348
  %v350 = vand.u32 %v90, 4294901760
  %v351 = vsub.f32 %v90, %v350
  %v352 = vand.u32 %v351, 4294901760
  %353 = vmatmul.f32.gmra.mxu0 %v352
  %v354 = vpop.f32.mrf.mxu0
  %v355 = vadd.f32 %v293, %v354
  %v356 = vand.u32 %v93, 4294901760
  %v357 = vsub.f32 %v93, %v356
  %v358 = vand.u32 %v357, 4294901760
  %359 = vmatmul.f32.gmra.mxu0 %v358
  %v360 = vpop.f32.mrf.mxu0
  %v361 = vadd.f32 %v298, %v360
  %v362 = vand.u32 %v96, 4294901760
  %v363 = vsub.f32 %v96, %v362
  %v364 = vand.u32 %v363, 4294901760
  %365 = vmatmul.f32.gmra.mxu0 %v364
  %v366 = vpop.f32.mrf.mxu0
  %v367 = vadd.f32 %v303, %v366
  %v368 = vand.u32 %v99, 4294901760
  %v369 = vsub.f32 %v99, %v368
  %v370 = vand.u32 %v369, 4294901760
  %371 = vmatmul.f32.gmra.mxu0 %v370
  %v372 = vpop.f32.mrf.mxu0
  %v373 = vadd.f32 %v308, %v372
  %v374 = vand.u32 %v102, 4294901760
  %v375 = vsub.f32 %v102, %v374
  %v376 = vand.u32 %v375, 4294901760
  %377 = vmatmul.f32.gmra.mxu0 %v376
  %v378 = vpop.f32.mrf.mxu0
  %v379 = vadd.f32 %v313, %v378
  %v380 = vand.u32 %v105, 4294901760
  %v381 = vsub.f32 %v105, %v380
  %v382 = vand.u32 %v381, 4294901760
  %383 = vmatmul.f32.gmra.mxu0 %v382
  %v384 = vpop.f32.mrf.mxu0
  %v385 = vadd.f32 %v318, %v384
  %v386 = vand.u32 %v108, 4294901760
  %v387 = vsub.f32 %v108, %v386
  %v388 = vand.u32 %v387, 4294901760
  %389 = vmatmul.f32.gmra.mxu0 %v388
  %v390 = vpop.f32.mrf.mxu0
  %v391 = vadd.f32 %v323, %v390
  %392 = vdwg.mxu0
  %393 = vmatpush.msra.mxu0 0.0
  %394 = vmatpush.msra.mxu0 0.0
  %395 = vmatpush.msra.mxu0 0.0
  %396 = vmatpush.msra.mxu0 0.0
  %397 = vmatpush.msra.mxu0 0.0
  %398 = vmatpush.msra.mxu0 0.0
  %399 = vmatpush.msra.mxu0 0.0
  %400 = vmatpush.msra.mxu0 0.0
  %401 = vmatpush.msra.mxu0 0.0
  %402 = vmatpush.msra.mxu0 0.0
  %403 = vmatpush.msra.mxu0 0.0
  %404 = vmatpush.msra.mxu0 0.0
  %405 = vmatpush.msra.mxu0 0.0
  %v406 = vand.u32 %v112, 4294901760
  %v407 = vsub.f32 %v112, %v406
  %v408 = vand.u32 %v407, 4294901760
  %409 = vmatpush.msra.mxu0 %v408
  %v410 = vand.u32 %v35, 4294901760
  %v411 = vsub.f32 %v35, %v410
  %v412 = vand.u32 %v411, 4294901760
  %413 = vmatpush.msra.mxu0 %v412
  %v414 = vand.u32 %v34, 4294901760
  %v415 = vsub.f32 %v34, %v414
  %v416 = vand.u32 %v415, 4294901760
  %417 = vmatpush.msra.mxu0 %v416
  %v418 = vand.u32 %v87, 4294901760
  %419 = vmatmul.f32.gmra.mxu0 %v418
  %v420 = vpop.f32.mrf.mxu0
  %v421 = vadd.f32 %v349, %v420
  %v422 = vand.u32 %v90, 4294901760
  %423 = vmatmul.f32.gmra.mxu0 %v422
  %v424 = vpop.f32.mrf.mxu0
  %v425 = vadd.f32 %v355, %v424
  %v426 = vand.u32 %v93, 4294901760
  %427 = vmatmul.f32.gmra.mxu0 %v426
  %v428 = vpop.f32.mrf.mxu0
  %v429 = vadd.f32 %v361, %v428
  %v430 = vand.u32 %v96, 4294901760
  %431 = vmatmul.f32.gmra.mxu0 %v430
  %v432 = vpop.f32.mrf.mxu0
  %v433 = vadd.f32 %v367, %v432
  %v434 = vand.u32 %v99, 4294901760
  %435 = vmatmul.f32.gmra.mxu0 %v434
  %v436 = vpop.f32.mrf.mxu0
  %v437 = vadd.f32 %v373, %v436
  %v438 = vand.u32 %v102, 4294901760
  %439 = vmatmul.f32.gmra.mxu0 %v438
  %v440 = vpop.f32.mrf.mxu0
  %v441 = vadd.f32 %v379, %v440
  %v442 = vand.u32 %v105, 4294901760
  %443 = vmatmul.f32.gmra.mxu0 %v442
  %v444 = vpop.f32.mrf.mxu0
  %v445 = vadd.f32 %v385, %v444
  %v446 = vand.u32 %v108, 4294901760
  %447 = vmatmul.f32.gmra.mxu0 %v446
  %v448 = vpop.f32.mrf.mxu0
  %v449 = vadd.f32 %v391, %v448
  %450 = vdwg.mxu0
  %451 = vmatpush.msra.mxu0 0.0
  %452 = vmatpush.msra.mxu0 0.0
  %453 = vmatpush.msra.mxu0 0.0
  %454 = vmatpush.msra.mxu0 0.0
  %455 = vmatpush.msra.mxu0 0.0
  %456 = vmatpush.msra.mxu0 0.0
  %457 = vmatpush.msra.mxu0 0.0
  %458 = vmatpush.msra.mxu0 0.0
  %459 = vmatpush.msra.mxu0 0.0
  %460 = vmatpush.msra.mxu0 0.0
  %461 = vmatpush.msra.mxu0 0.0
  %462 = vmatpush.msra.mxu0 0.0
  %463 = vmatpush.msra.mxu0 0.0
  %v464 = vand.u32 %v112, 4294901760
  %465 = vmatpush.msra.mxu0 %v464
  %v466 = vand.u32 %v35, 4294901760
  %467 = vmatpush.msra.mxu0 %v466
  %v468 = vand.u32 %v34, 4294901760
  %469 = vmatpush.msra.mxu0 %v468
  %v470 = vand.u32 %v87, 4294901760
  %471 = vmatmul.f32.gmra.mxu0 %v470
  %v472 = vpop.f32.mrf.mxu0
  %v473 = vadd.f32 %v421, %v472
  %v474 = vand.u32 %v90, 4294901760
  %475 = vmatmul.f32.gmra.mxu0 %v474
  %v476 = vpop.f32.mrf.mxu0
  %v477 = vadd.f32 %v425, %v476
  %v478 = vand.u32 %v93, 4294901760
  %479 = vmatmul.f32.gmra.mxu0 %v478
  %v480 = vpop.f32.mrf.mxu0
  %v481 = vadd.f32 %v429, %v480
  %v482 = vand.u32 %v96, 4294901760
  %483 = vmatmul.f32.gmra.mxu0 %v482
  %v484 = vpop.f32.mrf.mxu0
  %v485 = vadd.f32 %v433, %v484
  %v486 = vand.u32 %v99, 4294901760
  %487 = vmatmul.f32.gmra.mxu0 %v486
  %v488 = vpop.f32.mrf.mxu0
  %v489 = vadd.f32 %v437, %v488
  %v490 = vand.u32 %v102, 4294901760
  %491 = vmatmul.f32.gmra.mxu0 %v490
  %v492 = vpop.f32.mrf.mxu0
  %v493 = vadd.f32 %v441, %v492
  %v494 = vand.u32 %v105, 4294901760
  %495 = vmatmul.f32.gmra.mxu0 %v494
  %v496 = vpop.f32.mrf.mxu0
  %v497 = vadd.f32 %v445, %v496
  %v498 = vand.u32 %v108, 4294901760
  %499 = vmatmul.f32.gmra.mxu0 %v498
  %v500 = vpop.f32.mrf.mxu0
  %v501 = vadd.f32 %v449, %v500
  %502 = vdwg.mxu0
  %v503 = vmax.f32 %v473, 0.0
  %v504 = vmax.f32 %v477, 0.0
  %v505 = vmax.f32 %v481, 0.0
  %v506 = vmax.f32 %v485, 0.0
  %v507 = vmax.f32 %v489, 0.0
  %v508 = vmax.f32 %v493, 0.0
  %v509 = vmax.f32 %v497, 0.0
  %v510 = vmax.f32 %v501, 0.0
  %v511 = vld [vmem:[%s3] sm:$0xff]
  %v512 = vld [vmem:[%s3 + $0x8] sm:$0xff]
  %v513 = vld [vmem:[%s3 + $0x10] sm:$0xff]
  %v514 = vld [vmem:[%s3 + $0x18] sm:$0xff]
  %v515 = vld [vmem:[%s4] sm:$0xff]
  %v516 = vld [vmem:[%s4 + $0x8] sm:$0xff]
  %v517 = vld [vmem:[%s4 + $0x10] sm:$0xff]
  %v518 = vld [vmem:[%s4 + $0x18] sm:$0xff]
  %520 = vset.pattern.permute.xlu0 0
  %521 = vperm.xlu0 %520, %v515
  %v522 = vpop.permute.xlu0 %521
  %525 = vset.pattern.permute.xlu0 0
  %526 = vperm.xlu0 %525, %v516
  %v527 = vpop.permute.xlu0 %526
  %530 = vset.pattern.permute.xlu0 0
  %531 = vperm.xlu0 %530, %v517
  %v532 = vpop.permute.xlu0 %531
  %535 = vset.pattern.permute.xlu0 0
  %536 = vperm.xlu0 %535, %v518
  %v537 = vpop.permute.xlu0 %536
  %vm539 = vcmask 523264
  %v541 = vsel %vm539, %v511, 0
  %v544 = vsel %vm539, %v512, 0
  %v547 = vsel %vm539, %v513, 0
  %v550 = vsel %vm539, %v514, 0
  %552 = vmatpush.msra.mxu0 0.0
  %553 = vmatpush.msra.mxu0 0.0
  %554 = vmatpush.msra.mxu0 0.0
  %555 = vmatpush.msra.mxu0 0.0
  %556 = vmatpush.msra.mxu0 0.0
  %557 = vmatpush.msra.mxu0 0.0
  %558 = vmatpush.msra.mxu0 0.0
  %559 = vmatpush.msra.mxu0 0.0
  %v560 = vand.u32 %v510, 4294901760
  %561 = vmatpush.msra.mxu0 %v560
  %v562 = vand.u32 %v509, 4294901760
  %563 = vmatpush.msra.mxu0 %v562
  %v564 = vand.u32 %v508, 4294901760
  %565 = vmatpush.msra.mxu0 %v564
  %v566 = vand.u32 %v507, 4294901760
  %567 = vmatpush.msra.mxu0 %v566
  %v568 = vand.u32 %v506, 4294901760
  %569 = vmatpush.msra.mxu0 %v568
  %v570 = vand.u32 %v505, 4294901760
  %571 = vmatpush.msra.mxu0 %v570
  %v572 = vand.u32 %v504, 4294901760
  %573 = vmatpush.msra.mxu0 %v572
  %v574 = vand.u32 %v503, 4294901760
  %575 = vmatpush.msra.mxu0 %v574
  %v576 = vand.u32 %v541, 4294901760
  %v577 = vsub.f32 %v541, %v576
  %v578 = vand.u32 %v577, 4294901760
  %v579 = vsub.f32 %v577, %v578
  %v580 = vand.u32 %v579, 4294901760
  %581 = vmatmul.f32.gmra.mxu0 %v580
  %v582 = vpop.f32.mrf.mxu0
  %v583 = vadd.f32 %v522, %v582
  %v584 = vand.u32 %v544, 4294901760
  %v585 = vsub.f32 %v544, %v584
  %v586 = vand.u32 %v585, 4294901760
  %v587 = vsub.f32 %v585, %v586
  %v588 = vand.u32 %v587, 4294901760
  %589 = vmatmul.f32.gmra.mxu0 %v588
  %v590 = vpop.f32.mrf.mxu0
  %v591 = vadd.f32 %v527, %v590
  %v592 = vand.u32 %v547, 4294901760
  %v593 = vsub.f32 %v547, %v592
  %v594 = vand.u32 %v593, 4294901760
  %v595 = vsub.f32 %v593, %v594
  %v596 = vand.u32 %v595, 4294901760
  %597 = vmatmul.f32.gmra.mxu0 %v596
  %v598 = vpop.f32.mrf.mxu0
  %v599 = vadd.f32 %v532, %v598
  %v600 = vand.u32 %v550, 4294901760
  %v601 = vsub.f32 %v550, %v600
  %v602 = vand.u32 %v601, 4294901760
  %v603 = vsub.f32 %v601, %v602
  %v604 = vand.u32 %v603, 4294901760
  %605 = vmatmul.f32.gmra.mxu0 %v604
  %v606 = vpop.f32.mrf.mxu0
  %v607 = vadd.f32 %v537, %v606
  %608 = vdwg.mxu0
  %609 = vmatpush.msra.mxu0 0.0
  %610 = vmatpush.msra.mxu0 0.0
  %611 = vmatpush.msra.mxu0 0.0
  %612 = vmatpush.msra.mxu0 0.0
  %613 = vmatpush.msra.mxu0 0.0
  %614 = vmatpush.msra.mxu0 0.0
  %615 = vmatpush.msra.mxu0 0.0
  %616 = vmatpush.msra.mxu0 0.0
  %v617 = vand.u32 %v510, 4294901760
  %v618 = vsub.f32 %v510, %v617
  %v619 = vand.u32 %v618, 4294901760
  %v620 = vsub.f32 %v618, %v619
  %v621 = vand.u32 %v620, 4294901760
  %622 = vmatpush.msra.mxu0 %v621
  %v623 = vand.u32 %v509, 4294901760
  %v624 = vsub.f32 %v509, %v623
  %v625 = vand.u32 %v624, 4294901760
  %v626 = vsub.f32 %v624, %v625
  %v627 = vand.u32 %v626, 4294901760
  %628 = vmatpush.msra.mxu0 %v627
  %v629 = vand.u32 %v508, 4294901760
  %v630 = vsub.f32 %v508, %v629
  %v631 = vand.u32 %v630, 4294901760
  %v632 = vsub.f32 %v630, %v631
  %v633 = vand.u32 %v632, 4294901760
  %634 = vmatpush.msra.mxu0 %v633
  %v635 = vand.u32 %v507, 4294901760
  %v636 = vsub.f32 %v507, %v635
  %v637 = vand.u32 %v636, 4294901760
  %v638 = vsub.f32 %v636, %v637
  %v639 = vand.u32 %v638, 4294901760
  %640 = vmatpush.msra.mxu0 %v639
  %v641 = vand.u32 %v506, 4294901760
  %v642 = vsub.f32 %v506, %v641
  %v643 = vand.u32 %v642, 4294901760
  %v644 = vsub.f32 %v642, %v643
  %v645 = vand.u32 %v644, 4294901760
  %646 = vmatpush.msra.mxu0 %v645
  %v647 = vand.u32 %v505, 4294901760
  %v648 = vsub.f32 %v505, %v647
  %v649 = vand.u32 %v648, 4294901760
  %v650 = vsub.f32 %v648, %v649
  %v651 = vand.u32 %v650, 4294901760
  %652 = vmatpush.msra.mxu0 %v651
  %v653 = vand.u32 %v504, 4294901760
  %v654 = vsub.f32 %v504, %v653
  %v655 = vand.u32 %v654, 4294901760
  %v656 = vsub.f32 %v654, %v655
  %v657 = vand.u32 %v656, 4294901760
  %658 = vmatpush.msra.mxu0 %v657
  %v659 = vand.u32 %v503, 4294901760
  %v660 = vsub.f32 %v503, %v659
  %v661 = vand.u32 %v660, 4294901760
  %v662 = vsub.f32 %v660, %v661
  %v663 = vand.u32 %v662, 4294901760
  %664 = vmatpush.msra.mxu0 %v663
  %v665 = vand.u32 %v541, 4294901760
  %666 = vmatmul.f32.gmra.mxu0 %v665
  %v667 = vpop.f32.mrf.mxu0
  %v668 = vadd.f32 %v583, %v667
  %v669 = vand.u32 %v544, 4294901760
  %670 = vmatmul.f32.gmra.mxu0 %v669
  %v671 = vpop.f32.mrf.mxu0
  %v672 = vadd.f32 %v591, %v671
  %v673 = vand.u32 %v547, 4294901760
  %674 = vmatmul.f32.gmra.mxu0 %v673
  %v675 = vpop.f32.mrf.mxu0
  %v676 = vadd.f32 %v599, %v675
  %v677 = vand.u32 %v550, 4294901760
  %678 = vmatmul.f32.gmra.mxu0 %v677
  %v679 = vpop.f32.mrf.mxu0
  %v680 = vadd.f32 %v607, %v679
  %681 = vdwg.mxu0
  %682 = vmatpush.msra.mxu0 0.0
  %683 = vmatpush.msra.mxu0 0.0
  %684 = vmatpush.msra.mxu0 0.0
  %685 = vmatpush.msra.mxu0 0.0
  %686 = vmatpush.msra.mxu0 0.0
  %687 = vmatpush.msra.mxu0 0.0
  %688 = vmatpush.msra.mxu0 0.0
  %689 = vmatpush.msra.mxu0 0.0
  %v690 = vand.u32 %v510, 4294901760
  %v691 = vsub.f32 %v510, %v690
  %692 = vmatpush.msra.mxu0 %v691
  %v693 = vand.u32 %v509, 4294901760
  %v694 = vsub.f32 %v509, %v693
  %695 = vmatpush.msra.mxu0 %v694
  %v696 = vand.u32 %v508, 4294901760
  %v697 = vsub.f32 %v508, %v696
  %698 = vmatpush.msra.mxu0 %v697
  %v699 = vand.u32 %v507, 4294901760
  %v700 = vsub.f32 %v507, %v699
  %701 = vmatpush.msra.mxu0 %v700
  %v702 = vand.u32 %v506, 4294901760
  %v703 = vsub.f32 %v506, %v702
  %704 = vmatpush.msra.mxu0 %v703
  %v705 = vand.u32 %v505, 4294901760
  %v706 = vsub.f32 %v505, %v705
  %707 = vmatpush.msra.mxu0 %v706
  %v708 = vand.u32 %v504, 4294901760
  %v709 = vsub.f32 %v504, %v708
  %710 = vmatpush.msra.mxu0 %v709
  %v711 = vand.u32 %v503, 4294901760
  %v712 = vsub.f32 %v503, %v711
  %713 = vmatpush.msra.mxu0 %v712
  %v714 = vand.u32 %v541, 4294901760
  %v715 = vsub.f32 %v541, %v714
  %716 = vmatmul.f32.gmra.mxu0 %v715
  %v717 = vpop.f32.mrf.mxu0
  %v718 = vadd.f32 %v668, %v717
  %v719 = vand.u32 %v544, 4294901760
  %v720 = vsub.f32 %v544, %v719
  %721 = vmatmul.f32.gmra.mxu0 %v720
  %v722 = vpop.f32.mrf.mxu0
  %v723 = vadd.f32 %v672, %v722
  %v724 = vand.u32 %v547, 4294901760
  %v725 = vsub.f32 %v547, %v724
  %726 = vmatmul.f32.gmra.mxu0 %v725
  %v727 = vpop.f32.mrf.mxu0
  %v728 = vadd.f32 %v676, %v727
  %v729 = vand.u32 %v550, 4294901760
  %v730 = vsub.f32 %v550, %v729
  %731 = vmatmul.f32.gmra.mxu0 %v730
  %v732 = vpop.f32.mrf.mxu0
  %v733 = vadd.f32 %v680, %v732
  %734 = vdwg.mxu0
  %735 = vmatpush.msra.mxu0 0.0
  %736 = vmatpush.msra.mxu0 0.0
  %737 = vmatpush.msra.mxu0 0.0
  %738 = vmatpush.msra.mxu0 0.0
  %739 = vmatpush.msra.mxu0 0.0
  %740 = vmatpush.msra.mxu0 0.0
  %741 = vmatpush.msra.mxu0 0.0
  %742 = vmatpush.msra.mxu0 0.0
  %v743 = vand.u32 %v510, 4294901760
  %744 = vmatpush.msra.mxu0 %v743
  %v745 = vand.u32 %v509, 4294901760
  %746 = vmatpush.msra.mxu0 %v745
  %v747 = vand.u32 %v508, 4294901760
  %748 = vmatpush.msra.mxu0 %v747
  %v749 = vand.u32 %v507, 4294901760
  %750 = vmatpush.msra.mxu0 %v749
  %v751 = vand.u32 %v506, 4294901760
  %752 = vmatpush.msra.mxu0 %v751
  %v753 = vand.u32 %v505, 4294901760
  %754 = vmatpush.msra.mxu0 %v753
  %v755 = vand.u32 %v504, 4294901760
  %756 = vmatpush.msra.mxu0 %v755
  %v757 = vand.u32 %v503, 4294901760
  %758 = vmatpush.msra.mxu0 %v757
  %v759 = vand.u32 %v541, 4294901760
  %v760 = vsub.f32 %v541, %v759
  %v761 = vand.u32 %v760, 4294901760
  %762 = vmatmul.f32.gmra.mxu0 %v761
  %v763 = vpop.f32.mrf.mxu0
  %v764 = vadd.f32 %v718, %v763
  %v765 = vand.u32 %v544, 4294901760
  %v766 = vsub.f32 %v544, %v765
  %v767 = vand.u32 %v766, 4294901760
  %768 = vmatmul.f32.gmra.mxu0 %v767
  %v769 = vpop.f32.mrf.mxu0
  %v770 = vadd.f32 %v723, %v769
  %v771 = vand.u32 %v547, 4294901760
  %v772 = vsub.f32 %v547, %v771
  %v773 = vand.u32 %v772, 4294901760
  %774 = vmatmul.f32.gmra.mxu0 %v773
  %v775 = vpop.f32.mrf.mxu0
  %v776 = vadd.f32 %v728, %v775
  %v777 = vand.u32 %v550, 4294901760
  %v778 = vsub.f32 %v550, %v777
  %v779 = vand.u32 %v778, 4294901760
  %780 = vmatmul.f32.gmra.mxu0 %v779
  %v781 = vpop.f32.mrf.mxu0
  %v782 = vadd.f32 %v733, %v781
  %783 = vdwg.mxu0
  %784 = vmatpush.msra.mxu0 0.0
  %785 = vmatpush.msra.mxu0 0.0
  %786 = vmatpush.msra.mxu0 0.0
  %787 = vmatpush.msra.mxu0 0.0
  %788 = vmatpush.msra.mxu0 0.0
  %789 = vmatpush.msra.mxu0 0.0
  %790 = vmatpush.msra.mxu0 0.0
  %791 = vmatpush.msra.mxu0 0.0
  %v792 = vand.u32 %v510, 4294901760
  %v793 = vsub.f32 %v510, %v792
  %v794 = vand.u32 %v793, 4294901760
  %795 = vmatpush.msra.mxu0 %v794
  %v796 = vand.u32 %v509, 4294901760
  %v797 = vsub.f32 %v509, %v796
  %v798 = vand.u32 %v797, 4294901760
  %799 = vmatpush.msra.mxu0 %v798
  %v800 = vand.u32 %v508, 4294901760
  %v801 = vsub.f32 %v508, %v800
  %v802 = vand.u32 %v801, 4294901760
  %803 = vmatpush.msra.mxu0 %v802
  %v804 = vand.u32 %v507, 4294901760
  %v805 = vsub.f32 %v507, %v804
  %v806 = vand.u32 %v805, 4294901760
  %807 = vmatpush.msra.mxu0 %v806
  %v808 = vand.u32 %v506, 4294901760
  %v809 = vsub.f32 %v506, %v808
  %v810 = vand.u32 %v809, 4294901760
  %811 = vmatpush.msra.mxu0 %v810
  %v812 = vand.u32 %v505, 4294901760
  %v813 = vsub.f32 %v505, %v812
  %v814 = vand.u32 %v813, 4294901760
  %815 = vmatpush.msra.mxu0 %v814
  %v816 = vand.u32 %v504, 4294901760
  %v817 = vsub.f32 %v504, %v816
  %v818 = vand.u32 %v817, 4294901760
  %819 = vmatpush.msra.mxu0 %v818
  %v820 = vand.u32 %v503, 4294901760
  %v821 = vsub.f32 %v503, %v820
  %v822 = vand.u32 %v821, 4294901760
  %823 = vmatpush.msra.mxu0 %v822
  %v824 = vand.u32 %v541, 4294901760
  %825 = vmatmul.f32.gmra.mxu0 %v824
  %v826 = vpop.f32.mrf.mxu0
  %v827 = vadd.f32 %v764, %v826
  %v828 = vand.u32 %v544, 4294901760
  %829 = vmatmul.f32.gmra.mxu0 %v828
  %v830 = vpop.f32.mrf.mxu0
  %v831 = vadd.f32 %v770, %v830
  %v832 = vand.u32 %v547, 4294901760
  %833 = vmatmul.f32.gmra.mxu0 %v832
  %v834 = vpop.f32.mrf.mxu0
  %v835 = vadd.f32 %v776, %v834
  %v836 = vand.u32 %v550, 4294901760
  %837 = vmatmul.f32.gmra.mxu0 %v836
  %v838 = vpop.f32.mrf.mxu0
  %v839 = vadd.f32 %v782, %v838
  %840 = vdwg.mxu0
  %841 = vmatpush.msra.mxu0 0.0
  %842 = vmatpush.msra.mxu0 0.0
  %843 = vmatpush.msra.mxu0 0.0
  %844 = vmatpush.msra.mxu0 0.0
  %845 = vmatpush.msra.mxu0 0.0
  %846 = vmatpush.msra.mxu0 0.0
  %847 = vmatpush.msra.mxu0 0.0
  %848 = vmatpush.msra.mxu0 0.0
  %v849 = vand.u32 %v510, 4294901760
  %850 = vmatpush.msra.mxu0 %v849
  %v851 = vand.u32 %v509, 4294901760
  %852 = vmatpush.msra.mxu0 %v851
  %v853 = vand.u32 %v508, 4294901760
  %854 = vmatpush.msra.mxu0 %v853
  %v855 = vand.u32 %v507, 4294901760
  %856 = vmatpush.msra.mxu0 %v855
  %v857 = vand.u32 %v506, 4294901760
  %858 = vmatpush.msra.mxu0 %v857
  %v859 = vand.u32 %v505, 4294901760
  %860 = vmatpush.msra.mxu0 %v859
  %v861 = vand.u32 %v504, 4294901760
  %862 = vmatpush.msra.mxu0 %v861
  %v863 = vand.u32 %v503, 4294901760
  %864 = vmatpush.msra.mxu0 %v863
  %v865 = vand.u32 %v541, 4294901760
  %866 = vmatmul.f32.gmra.mxu0 %v865
  %v867 = vpop.f32.mrf.mxu0
  %v868 = vadd.f32 %v827, %v867
  %v869 = vand.u32 %v544, 4294901760
  %870 = vmatmul.f32.gmra.mxu0 %v869
  %v871 = vpop.f32.mrf.mxu0
  %v872 = vadd.f32 %v831, %v871
  %v873 = vand.u32 %v547, 4294901760
  %874 = vmatmul.f32.gmra.mxu0 %v873
  %v875 = vpop.f32.mrf.mxu0
  %v876 = vadd.f32 %v835, %v875
  %v877 = vand.u32 %v550, 4294901760
  %878 = vmatmul.f32.gmra.mxu0 %v877
  %v879 = vpop.f32.mrf.mxu0
  %v880 = vadd.f32 %v839, %v879
  %881 = vdwg.mxu0
  %v882 = vmax.f32 %v868, 0.0
  %v883 = vmax.f32 %v872, 0.0
  %v884 = vmax.f32 %v876, 0.0
  %v885 = vmax.f32 %v880, 0.0
  %v886 = vld [vmem:[%s5] sm:$0xff]
  %v887 = vld [vmem:[%s5 + $0x8] sm:$0xff]
  %v888 = vld [vmem:[%s5 + $0x10] sm:$0x3]
  %v889 = vld [vmem:[%s6] sm:$0xff]
  %v890 = vld [vmem:[%s6 + $0x8] sm:$0xff]
  %v891 = vld [vmem:[%s6 + $0x10] sm:$0x3]
  %893 = vset.pattern.permute.xlu0 0
  %894 = vperm.xlu0 %893, %v889
  %v895 = vpop.permute.xlu0 %894
  %898 = vset.pattern.permute.xlu0 0
  %899 = vperm.xlu0 %898, %v890
  %v900 = vpop.permute.xlu0 %899
  %903 = vset.pattern.permute.xlu0 0
  %904 = vperm.xlu0 %903, %v891
  %v905 = vpop.permute.xlu0 %904
  %vm907 = vcmask 261120
  %v909 = vsel %vm907, %v886, 0
  %v912 = vsel %vm907, %v887, 0
  %v915 = vsel %vm907, %v888, 0
  %917 = vmatpush.msra.mxu0 0.0
  %918 = vmatpush.msra.mxu0 0.0
  %919 = vmatpush.msra.mxu0 0.0
  %920 = vmatpush.msra.mxu0 0.0
  %921 = vmatpush.msra.mxu0 0.0
  %922 = vmatpush.msra.mxu0 0.0
  %923 = vmatpush.msra.mxu0 0.0
  %924 = vmatpush.msra.mxu0 0.0
  %925 = vmatpush.msra.mxu0 0.0
  %926 = vmatpush.msra.mxu0 0.0
  %927 = vmatpush.msra.mxu0 0.0
  %928 = vmatpush.msra.mxu0 0.0
  %v929 = vand.u32 %v885, 4294901760
  %930 = vmatpush.msra.mxu0 %v929
  %v931 = vand.u32 %v884, 4294901760
  %932 = vmatpush.msra.mxu0 %v931
  %v933 = vand.u32 %v883, 4294901760
  %934 = vmatpush.msra.mxu0 %v933
  %v935 = vand.u32 %v882, 4294901760
  %936 = vmatpush.msra.mxu0 %v935
  %v937 = vand.u32 %v909, 4294901760
  %v938 = vsub.f32 %v909, %v937
  %v939 = vand.u32 %v938, 4294901760
  %v940 = vsub.f32 %v938, %v939
  %v941 = vand.u32 %v940, 4294901760
  %942 = vmatmul.f32.gmra.mxu0 %v941
  %v943 = vpop.f32.mrf.mxu0
  %v944 = vadd.f32 %v895, %v943
  %v945 = vand.u32 %v912, 4294901760
  %v946 = vsub.f32 %v912, %v945
  %v947 = vand.u32 %v946, 4294901760
  %v948 = vsub.f32 %v946, %v947
  %v949 = vand.u32 %v948, 4294901760
  %950 = vmatmul.f32.gmra.mxu0 %v949
  %v951 = vpop.f32.mrf.mxu0
  %v952 = vadd.f32 %v900, %v951
  %v953 = vand.u32 %v915, 4294901760
  %v954 = vsub.f32 %v915, %v953
  %v955 = vand.u32 %v954, 4294901760
  %v956 = vsub.f32 %v954, %v955
  %v957 = vand.u32 %v956, 4294901760
  %958 = vmatmul.f32.gmra.mxu0 %v957
  %v959 = vpop.f32.mrf.mxu0
  %v960 = vadd.f32 %v905, %v959
  %961 = vdwg.mxu0
  %962 = vmatpush.msra.mxu0 0.0
  %963 = vmatpush.msra.mxu0 0.0
  %964 = vmatpush.msra.mxu0 0.0
  %965 = vmatpush.msra.mxu0 0.0
  %966 = vmatpush.msra.mxu0 0.0
  %967 = vmatpush.msra.mxu0 0.0
  %968 = vmatpush.msra.mxu0 0.0
  %969 = vmatpush.msra.mxu0 0.0
  %970 = vmatpush.msra.mxu0 0.0
  %971 = vmatpush.msra.mxu0 0.0
  %972 = vmatpush.msra.mxu0 0.0
  %973 = vmatpush.msra.mxu0 0.0
  %v974 = vand.u32 %v885, 4294901760
  %v975 = vsub.f32 %v885, %v974
  %v976 = vand.u32 %v975, 4294901760
  %v977 = vsub.f32 %v975, %v976
  %v978 = vand.u32 %v977, 4294901760
  %979 = vmatpush.msra.mxu0 %v978
  %v980 = vand.u32 %v884, 4294901760
  %v981 = vsub.f32 %v884, %v980
  %v982 = vand.u32 %v981, 4294901760
  %v983 = vsub.f32 %v981, %v982
  %v984 = vand.u32 %v983, 4294901760
  %985 = vmatpush.msra.mxu0 %v984
  %v986 = vand.u32 %v883, 4294901760
  %v987 = vsub.f32 %v883, %v986
  %v988 = vand.u32 %v987, 4294901760
  %v989 = vsub.f32 %v987, %v988
  %v990 = vand.u32 %v989, 4294901760
  %991 = vmatpush.msra.mxu0 %v990
  %v992 = vand.u32 %v882, 4294901760
  %v993 = vsub.f32 %v882, %v992
  %v994 = vand.u32 %v993, 4294901760
  %v995 = vsub.f32 %v993, %v994
  %v996 = vand.u32 %v995, 4294901760
  %997 = vmatpush.msra.mxu0 %v996
  %v998 = vand.u32 %v909, 4294901760
  %999 = vmatmul.f32.gmra.mxu0 %v998
  %v1000 = vpop.f32.mrf.mxu0
  %v1001 = vadd.f32 %v944, %v1000
  %v1002 = vand.u32 %v912, 4294901760
  %1003 = vmatmul.f32.gmra.mxu0 %v1002
  %v1004 = vpop.f32.mrf.mxu0
  %v1005 = vadd.f32 %v952, %v1004
  %v1006 = vand.u32 %v915, 4294901760
  %1007 = vmatmul.f32.gmra.mxu0 %v1006
  %v1008 = vpop.f32.mrf.mxu0
  %v1009 = vadd.f32 %v960, %v1008
  %1010 = vdwg.mxu0
  %1011 = vmatpush.msra.mxu0 0.0
  %1012 = vmatpush.msra.mxu0 0.0
  %1013 = vmatpush.msra.mxu0 0.0
  %1014 = vmatpush.msra.mxu0 0.0
  %1015 = vmatpush.msra.mxu0 0.0
  %1016 = vmatpush.msra.mxu0 0.0
  %1017 = vmatpush.msra.mxu0 0.0
  %1018 = vmatpush.msra.mxu0 0.0
  %1019 = vmatpush.msra.mxu0 0.0
  %1020 = vmatpush.msra.mxu0 0.0
  %1021 = vmatpush.msra.mxu0 0.0
  %1022 = vmatpush.msra.mxu0 0.0
  %v1023 = vand.u32 %v885, 4294901760
  %v1024 = vsub.f32 %v885, %v1023
  %1025 = vmatpush.msra.mxu0 %v1024
  %v1026 = vand.u32 %v884, 4294901760
  %v1027 = vsub.f32 %v884, %v1026
  %1028 = vmatpush.msra.mxu0 %v1027
  %v1029 = vand.u32 %v883, 4294901760
  %v1030 = vsub.f32 %v883, %v1029
  %1031 = vmatpush.msra.mxu0 %v1030
  %v1032 = vand.u32 %v882, 4294901760
  %v1033 = vsub.f32 %v882, %v1032
  %1034 = vmatpush.msra.mxu0 %v1033
  %v1035 = vand.u32 %v909, 4294901760
  %v1036 = vsub.f32 %v909, %v1035
  %1037 = vmatmul.f32.gmra.mxu0 %v1036
  %v1038 = vpop.f32.mrf.mxu0
  %v1039 = vadd.f32 %v1001, %v1038
  %v1040 = vand.u32 %v912, 4294901760
  %v1041 = vsub.f32 %v912, %v1040
  %1042 = vmatmul.f32.gmra.mxu0 %v1041
  %v1043 = vpop.f32.mrf.mxu0
  %v1044 = vadd.f32 %v1005, %v1043
  %v1045 = vand.u32 %v915, 4294901760
  %v1046 = vsub.f32 %v915, %v1045
  %1047 = vmatmul.f32.gmra.mxu0 %v1046
  %v1048 = vpop.f32.mrf.mxu0
  %v1049 = vadd.f32 %v1009, %v1048
  %1050 = vdwg.mxu0
  %1051 = vmatpush.msra.mxu0 0.0
  %1052 = vmatpush.msra.mxu0 0.0
  %1053 = vmatpush.msra.mxu0 0.0
  %1054 = vmatpush.msra.mxu0 0.0
  %1055 = vmatpush.msra.mxu0 0.0
  %1056 = vmatpush.msra.mxu0 0.0
  %1057 = vmatpush.msra.mxu0 0.0
  %1058 = vmatpush.msra.mxu0 0.0
  %1059 = vmatpush.msra.mxu0 0.0
  %1060 = vmatpush.msra.mxu0 0.0
  %1061 = vmatpush.msra.mxu0 0.0
  %1062 = vmatpush.msra.mxu0 0.0
  %v1063 = vand.u32 %v885, 4294901760
  %1064 = vmatpush.msra.mxu0 %v1063
  %v1065 = vand.u32 %v884, 4294901760
  %1066 = vmatpush.msra.mxu0 %v1065
  %v1067 = vand.u32 %v883, 4294901760
  %1068 = vmatpush.msra.mxu0 %v1067
  %v1069 = vand.u32 %v882, 4294901760
  %1070 = vmatpush.msra.mxu0 %v1069
  %v1071 = vand.u32 %v909, 4294901760
  %v1072 = vsub.f32 %v909, %v1071
  %v1073 = vand.u32 %v1072, 4294901760
  %1074 = vmatmul.f32.gmra.mxu0 %v1073
  %v1075 = vpop.f32.mrf.mxu0
  %v1076 = vadd.f32 %v1039, %v1075
  %v1077 = vand.u32 %v912, 4294901760
  %v1078 = vsub.f32 %v912, %v1077
  %v1079 = vand.u32 %v1078, 4294901760
  %1080 = vmatmul.f32.gmra.mxu0 %v1079
  %v1081 = vpop.f32.mrf.mxu0
  %v1082 = vadd.f32 %v1044, %v1081
  %v1083 = vand.u32 %v915, 4294901760
  %v1084 = vsub.f32 %v915, %v1083
  %v1085 = vand.u32 %v1084, 4294901760
  %1086 = vmatmul.f32.gmra.mxu0 %v1085
  %v1087 = vpop.f32.mrf.mxu0
  %v1088 = vadd.f32 %v1049, %v1087
  %1089 = vdwg.mxu0
  %1090 = vmatpush.msra.mxu0 0.0
  %1091 = vmatpush.msra.mxu0 0.0
  %1092 = vmatpush.msra.mxu0 0.0
  %1093 = vmatpush.msra.mxu0 0.0
  %1094 = vmatpush.msra.mxu0 0.0
  %1095 = vmatpush.msra.mxu0 0.0
  %1096 = vmatpush.msra.mxu0 0.0
  %1097 = vmatpush.msra.mxu0 0.0
  %1098 = vmatpush.msra.mxu0 0.0
  %1099 = vmatpush.msra.mxu0 0.0
  %1100 = vmatpush.msra.mxu0 0.0
  %1101 = vmatpush.msra.mxu0 0.0
  %v1102 = vand.u32 %v885, 4294901760
  %v1103 = vsub.f32 %v885, %v1102
  %v1104 = vand.u32 %v1103, 4294901760
  %1105 = vmatpush.msra.mxu0 %v1104
  %v1106 = vand.u32 %v884, 4294901760
  %v1107 = vsub.f32 %v884, %v1106
  %v1108 = vand.u32 %v1107, 4294901760
  %1109 = vmatpush.msra.mxu0 %v1108
  %v1110 = vand.u32 %v883, 4294901760
  %v1111 = vsub.f32 %v883, %v1110
  %v1112 = vand.u32 %v1111, 4294901760
  %1113 = vmatpush.msra.mxu0 %v1112
  %v1114 = vand.u32 %v882, 4294901760
  %v1115 = vsub.f32 %v882, %v1114
  %v1116 = vand.u32 %v1115, 4294901760
  %1117 = vmatpush.msra.mxu0 %v1116
  %v1118 = vand.u32 %v909, 4294901760
  %1119 = vmatmul.f32.gmra.mxu0 %v1118
  %v1120 = vpop.f32.mrf.mxu0
  %v1121 = vadd.f32 %v1076, %v1120
  %v1122 = vand.u32 %v912, 4294901760
  %1123 = vmatmul.f32.gmra.mxu0 %v1122
  %v1124 = vpop.f32.mrf.mxu0
  %v1125 = vadd.f32 %v1082, %v1124
  %v1126 = vand.u32 %v915, 4294901760
  %1127 = vmatmul.f32.gmra.mxu0 %v1126
  %v1128 = vpop.f32.mrf.mxu0
  %v1129 = vadd.f32 %v1088, %v1128
  %1130 = vdwg.mxu0
  %1131 = vmatpush.msra.mxu0 0.0
  %1132 = vmatpush.msra.mxu0 0.0
  %1133 = vmatpush.msra.mxu0 0.0
  %1134 = vmatpush.msra.mxu0 0.0
  %1135 = vmatpush.msra.mxu0 0.0
  %1136 = vmatpush.msra.mxu0 0.0
  %1137 = vmatpush.msra.mxu0 0.0
  %1138 = vmatpush.msra.mxu0 0.0
  %1139 = vmatpush.msra.mxu0 0.0
  %1140 = vmatpush.msra.mxu0 0.0
  %1141 = vmatpush.msra.mxu0 0.0
  %1142 = vmatpush.msra.mxu0 0.0
  %v1143 = vand.u32 %v885, 4294901760
  %1144 = vmatpush.msra.mxu0 %v1143
  %v1145 = vand.u32 %v884, 4294901760
  %1146 = vmatpush.msra.mxu0 %v1145
  %v1147 = vand.u32 %v883, 4294901760
  %1148 = vmatpush.msra.mxu0 %v1147
  %v1149 = vand.u32 %v882, 4294901760
  %1150 = vmatpush.msra.mxu0 %v1149
  %v1151 = vand.u32 %v909, 4294901760
  %1152 = vmatmul.f32.gmra.mxu0 %v1151
  %v1153 = vpop.f32.mrf.mxu0
  %v1154 = vadd.f32 %v1121, %v1153
  %v1155 = vand.u32 %v912, 4294901760
  %1156 = vmatmul.f32.gmra.mxu0 %v1155
  %v1157 = vpop.f32.mrf.mxu0
  %v1158 = vadd.f32 %v1125, %v1157
  %v1159 = vand.u32 %v915, 4294901760
  %1160 = vmatmul.f32.gmra.mxu0 %v1159
  %v1161 = vpop.f32.mrf.mxu0
  %v1162 = vadd.f32 %v1129, %v1161
  %1163 = vdwg.mxu0
  %vm1164 = vcmask 64512
  %1165 = vst.msk [vmem:[%s7] sm:$0xff] %vm1164, %v1154
  %1166 = vst.msk [vmem:[%s7 + $0x8] sm:$0xff] %vm1164, %v1158
  %vm1167 = vcmask 58368
  %1168 = vst.msk [vmem:[%s7 + $0x10] sm:$0x3] %vm1167, %v1162
  // Predicated region
  $region30: #{nestmlp_forward.1} parent=0 // pred_check
    _
  $region31: #{nestmlp_forward.1} parent=0 // pred_check_branch
    %1170 = sbr.rel (0) target = $region33
  $region32: #{nestmlp_forward.1} parent=0 // pred_region
    _
  $region33: #{nestmlp_forward.1} parent=0 // pred_fallthru
    _
  // Predicated region
  $region34: #{nestmlp_forward.1} parent=0 // pred_check
    _
  $region35: #{nestmlp_forward.1} parent=0 // pred_check_branch
    %1172 = sbr.rel (0) target = $region37
  $region36: #{nestmlp_forward.1} parent=0 // pred_region
    _
  $region37: #{nestmlp_forward.1} parent=0 // pred_fallthru
    _

</llo_original>
